<compile_context>
chip_gen: v5e
topology: v5e:2x2
jax: 0.10.0
libtpu: 0.0.40
codegen_flags: <defaults>
</compile_context>

<pallas_src>
import functools

import jax
import jax.numpy as jnp
from jax.experimental import pallas as pl
from jax.experimental.pallas import tpu as pltpu


def _round_up(x, m):
    return ((x + m - 1) // m) * m


def _vmem_capacity_bytes():
    """Generation-aware VMEM capacity (128 MiB on v5e/v6e, 64 MiB per TC on v7x)."""
    try:
        return int(pltpu.get_tpu_info().vmem_capacity_bytes)
    except Exception:
        return 64 * 1024 * 1024  # conservative (v7x per-TC figure)


def _apply_activation(a, activation):
    if activation == "relu":
        return jnp.maximum(a, 0.0)
    # Exact (erf) GELU, matching torch.nn.functional.gelu's default.
    # (approximate=True would route through the EUP tanh and be slightly faster,
    #  but changes numerics vs the PyTorch reference.)
    return jax.nn.gelu(a, approximate=False)


# ----------------------------- kernels -------------------------------------


def _ffn_kernel_resident(x_ref, w1_ref, b1_ref, w2_ref, b2_ref, o_ref, *, activation):
    """Weights fully resident in VMEM; 1-D grid over row tiles."""
    a = jnp.dot(x_ref[...], w1_ref[...], preferred_element_type=jnp.float32)
    a = a + b1_ref[...]                       # bias + activation in f32
    a = _apply_activation(a, activation)
    # TODO(synk): training-mode dropout (p=0.1) skipped; inference semantics only.
    out = jnp.dot(a.astype(w2_ref.dtype), w2_ref[...],
                  preferred_element_type=jnp.float32)
    o_ref[...] = (out + b2_ref[...]).astype(o_ref.dtype)


def _ffn_kernel_tiled(x_ref, w1_ref, b1_ref, w2_ref, b2_ref, o_ref, acc_ref, *,
                      activation):
    """Hidden-dim streamed; grid=(row_tiles, hidden_tiles) with f32 accumulator."""
    j = pl.program_id(1)

    @pl.when(j == 0)
    def _init():
        acc_ref[...] = jnp.zeros_like(acc_ref)

    a = jnp.dot(x_ref[...], w1_ref[...], preferred_element_type=jnp.float32)
    a = a + b1_ref[...]
    a = _apply_activation(a, activation)
    # TODO(synk): training-mode dropout (p=0.1) skipped; inference semantics only.
    acc_ref[...] += jnp.dot(a.astype(w2_ref.dtype), w2_ref[...],
                            preferred_element_type=jnp.float32)

    @pl.when(j == pl.num_programs(1) - 1)
    def _finalize():
        o_ref[...] = (acc_ref[...] + b2_ref[...]).astype(o_ref.dtype)


# ----------------------------- wrapper --------------------------------------


def feed_forward(x, w1, b1, w2, b2, *, activation="relu",
                 compute_dtype=jnp.bfloat16,
                 block_rows=None, block_hidden=None,
                 weights_resident=None):
    """FeedForward forward pass: activation(x @ w1 + b1) @ w2 + b2.

    x:  (..., h)
    w1: (h, hidden_dim)   b1: (hidden_dim,)
    w2: (hidden_dim, out) b2: (out,)

    compute_dtype: dtype used on the MXU (default bf16; accumulation stays f32).
    """
    assert activation in ("relu", "gelu"), "Unsupported activation type"
    orig_shape = x.shape
    h = orig_shape[-1]
    hd = w1.shape[1]
    out_dim = w2.shape[1]
    assert w1.shape == (h, hd) and b1.shape == (hd,)
    assert w2.shape == (hd, out_dim) and b2.shape == (out_dim,)

    out_dtype = x.dtype
    compute_dtype = jnp.dtype(x.dtype if compute_dtype is None else compute_dtype)
    csize = compute_dtype.itemsize
    osize = jnp.dtype(out_dtype).itemsize

    x2 = x.reshape(-1, h).astype(compute_dtype)
    w1c = w1.astype(compute_dtype)
    w2c = w2.astype(compute_dtype)
    b1_2 = b1.astype(jnp.float32).reshape(1, hd)
    b2_2 = b2.astype(jnp.float32).reshape(1, out_dim)
    rows = x2.shape[0]

    # Generation-aware scoped-VMEM budget (~96 MiB on 128 MiB parts, ~48 MiB on v7x).
    vmem_cap = _vmem_capacity_bytes()
    vmem_limit = min(vmem_cap - (16 << 20), int(0.75 * vmem_cap))
    vmem_limit = max(32 << 20, min(vmem_limit, 100 << 20))

    # Row tile: dtype-native sublane multiple so partial tiles avoid masked stores.
    sublane = 16 if csize == 2 else (32 if csize == 1 else 8)
    if block_rows is None:
        block_rows = 1024 if vmem_cap >= (96 << 20) else 512
    tm = min(block_rows, _round_up(rows, sublane))

    # ---------------- Path A: weights resident in VMEM ----------------------
    def resident_bytes(tm_):
        wts = (h * hd + hd * out_dim) * csize + (hd + out_dim) * 4
        return (2 * wts                      # weight/bias blocks (double-buffer bound)
                + 2 * tm_ * h * csize        # x tile (double-buffered)
                + 2 * tm_ * out_dim * osize  # out tile (double-buffered)
                + tm_ * hd * 4)              # f32 intermediate activation

    if weights_resident is None:
        weights_resident = resident_bytes(min(tm, 128)) <= vmem_limit

    if weights_resident:
        while tm > sublane and resident_bytes(tm) > vmem_limit:
            tm = max(sublane, tm // 2)
        grid = (pl.cdiv(rows, tm),)
        out = pl.pallas_call(
            functools.partial(_ffn_kernel_resident, activation=activation),
            out_shape=jax.ShapeDtypeStruct((rows, out_dim), out_dtype),
            grid_spec=pltpu.PrefetchScalarGridSpec(
                num_scalar_prefetch=0,
                grid=grid,
                in_specs=[
                    pl.BlockSpec((tm, h), lambda i: (i, 0)),        # x rows tile
                    # Constant index maps -> fetched from HBM once, stay resident.
                    pl.BlockSpec((h, hd), lambda i: (0, 0)),        # W1 (full)
                    pl.BlockSpec((1, hd), lambda i: (0, 0)),        # b1 (full)
                    pl.BlockSpec((hd, out_dim), lambda i: (0, 0)),  # W2 (full)
                    pl.BlockSpec((1, out_dim), lambda i: (0, 0)),   # b2 (full)
                ],
                out_specs=pl.BlockSpec((tm, out_dim), lambda i: (i, 0)),
            ),
            compiler_params=pltpu.CompilerParams(
                dimension_semantics=("parallel",),
                vmem_limit_bytes=vmem_limit,
            ),
        )(x2, w1c, b1_2, w2c, b2_2)
        return out.reshape(orig_shape[:-1] + (out_dim,))

    # ---------------- Path B: hidden-dim streamed + f32 accumulator ---------
    if block_hidden is None:
        block_hidden = 512
    if hd <= block_hidden:
        th, hd_pad = hd, hd
    else:
        hd_pad = _round_up(hd, 128)                 # minimal pad (lane multiple only)
        th = max(128, (min(block_hidden, hd_pad) // 128) * 128)
        while hd_pad % th != 0:                     # th must divide hd_pad exactly
            th -= 128
    if hd_pad != hd:
        # Zero rows/cols contribute nothing: act(0 + 0) = 0 through zero rows of W2.
        # TODO(synk): pad weights once at init instead of per call.
        w1c = jnp.pad(w1c, ((0, 0), (0, hd_pad - hd)))
        b1_2 = jnp.pad(b1_2, ((0, 0), (0, hd_pad - hd)))
        w2c = jnp.pad(w2c, ((0, hd_pad - hd), (0, 0)))

    def tiled_bytes(tm_, th_):
        return (2 * tm_ * h * csize
                + 2 * (h * th_ * csize + th_ * 4 + th_ * out_dim * csize + out_dim * 4)
                + 2 * tm_ * out_dim * osize
                + tm_ * out_dim * 4       # f32 accumulator scratch
                + tm_ * th_ * 4)          # f32 intermediate activation

    while tm > sublane and tiled_bytes(tm, th) > vmem_limit:
        tm = max(sublane, tm // 2)

    grid = (pl.cdiv(rows, tm), hd_pad // th)
    out = pl.pallas_call(
        functools.partial(_ffn_kernel_tiled, activation=activation),
        out_shape=jax.ShapeDtypeStruct((rows, out_dim), out_dtype),
        grid_spec=pltpu.PrefetchScalarGridSpec(
            num_scalar_prefetch=0,
            grid=grid,
            in_specs=[
                pl.BlockSpec((tm, h), lambda i, j: (i, 0)),        # x rows tile
                pl.BlockSpec((h, th), lambda i, j: (0, j)),        # W1 hidden chunk
                pl.BlockSpec((1, th), lambda i, j: (0, j)),        # b1 hidden chunk
                pl.BlockSpec((th, out_dim), lambda i, j: (j, 0)),  # W2 hidden chunk
                pl.BlockSpec((1, out_dim), lambda i, j: (0, 0)),   # b2
            ],
            out_specs=pl.BlockSpec((tm, out_dim), lambda i, j: (i, 0)),
            scratch_shapes=[pltpu.VMEM((tm, out_dim), jnp.float32)],
        ),
        compiler_params=pltpu.CompilerParams(
            dimension_semantics=("parallel", "arbitrary"),
            vmem_limit_bytes=vmem_limit,
        ),
    )(x2, w1c, b1_2, w2c, b2_2)
    return out.reshape(orig_shape[:-1] + (out_dim,))


# ----------------------------- demo / check ---------------------------------

if __name__ == "__main__":
    key = jax.random.PRNGKey(0)
    k1, k2, k3, k4, k5 = jax.random.split(key, 5)

    # Small shapes consistent with the module: h=32 -> hiddenDim=4*h=128, outDim=h.
    batch, seq, h = 2, 8, 32
    hidden_dim = 4 * h
    out_dim = h

    x = jax.random.normal(k1, (batch, seq, h), dtype=jnp.float32)
    w1 = jax.random.normal(k2, (h, hidden_dim), dtype=jnp.float32) * (h ** -0.5)
    b1 = jax.random.normal(k3, (hidden_dim,), dtype=jnp.float32) * 0.01
    w2 = jax.random.normal(k4, (hidden_dim, out_dim), dtype=jnp.float32) * (hidden_dim ** -0.5)
    b2 = jax.random.normal(k5, (out_dim,), dtype=jnp.float32) * 0.01

    # Plain-JAX references (eval-mode forward: W1 -> act -> W2).
    ref_relu = jnp.maximum(x @ w1 + b1, 0.0) @ w2 + b2
    ref_gelu = jax.nn.gelu(x @ w1 + b1, approximate=False) @ w2 + b2

    # 1) Default fast path: weights-resident, bf16 MXU, f32 accumulation.
    out_bf16 = jax.block_until_ready(feed_forward(x, w1, b1, w2, b2, activation="relu"))
    assert out_bf16.shape == ref_relu.shape
    assert jnp.allclose(out_bf16, ref_relu, atol=5e-2, rtol=5e-2), "bf16 resident mismatch"

    # 2) f32 compute, weights-resident (tight tolerance vs reference).
    out_f32 = jax.block_until_ready(
        feed_forward(x, w1, b1, w2, b2, activation="relu", compute_dtype=jnp.float32))
    assert jnp.allclose(out_f32, ref_relu, atol=1e-4, rtol=1e-4), "f32 resident mismatch"

    # 3) Streamed/accumulator fallback path (forced), f32 compute.
    out_tiled = jax.block_until_ready(
        feed_forward(x, w1, b1, w2, b2, activation="relu",
                     compute_dtype=jnp.float32, weights_resident=False))
    assert jnp.allclose(out_tiled, ref_relu, atol=1e-4, rtol=1e-4), "tiled path mismatch"

    # 4) GELU activation, f32 compute.
    out_gelu = jax.block_until_ready(
        feed_forward(x, w1, b1, w2, b2, activation="gelu", compute_dtype=jnp.float32))
    assert jnp.allclose(out_gelu, ref_gelu, atol=1e-4, rtol=1e-4), "gelu mismatch"

    print("KERNEL_OK")
</pallas_src>

<mosaic_0001>
module attributes {stable_mosaic.version = 11 : i64} {
  func.func @_ffn_kernel_resident(%arg0: i32, %arg1: memref<16x32xbf16, #tpu.memory_space<vmem>>, %arg2: memref<32x128xbf16, #tpu.memory_space<vmem>>, %arg3: memref<1x128xf32, #tpu.memory_space<vmem>>, %arg4: memref<128x32xbf16, #tpu.memory_space<vmem>>, %arg5: memref<1x32xf32, #tpu.memory_space<vmem>>, %arg6: memref<16x32xf32, #tpu.memory_space<vmem>>) attributes {dimension_semantics = [#tpu.dimension_semantics<parallel>], iteration_bounds = array<i64: 1>, scalar_prefetch = 0 : i64, scratch_operands = 0 : i64, tpu.core_type = #tpu.core_type<tc>, window_params = [{transform_indices = @transform_0, window_bounds = array<i64: 16, 32>}, {pipeline_mode = #tpu.pipeline_mode<synchronous>, transform_indices = @transform_1, window_bounds = array<i64: 32, 128>}, {pipeline_mode = #tpu.pipeline_mode<synchronous>, transform_indices = @transform_2, window_bounds = array<i64: 1, 128>}, {pipeline_mode = #tpu.pipeline_mode<synchronous>, transform_indices = @transform_3, window_bounds = array<i64: 128, 32>}, {pipeline_mode = #tpu.pipeline_mode<synchronous>, transform_indices = @transform_4, window_bounds = array<i64: 1, 32>}, {transform_indices = @transform_5, window_bounds = array<i64: 16, 32>}]} {
    %c0 = arith.constant 0 : index
    %c0_0 = arith.constant 0 : index
    %0 = vector.load %arg1[%c0, %c0_0] : memref<16x32xbf16, #tpu.memory_space<vmem>>, vector<16x32xbf16>
    %c0_1 = arith.constant 0 : index
    %c0_2 = arith.constant 0 : index
    %1 = vector.load %arg2[%c0_1, %c0_2] : memref<32x128xbf16, #tpu.memory_space<vmem>>, vector<32x128xbf16>
    %cst = arith.constant dense<0.000000e+00> : vector<16x128xf32>
    %2 = tpu.matmul %0, %1, %cst {dimension_numbers = #tpu.dot_dimension_numbers<[1], [0], [0], [1], [0, 0, 1, 1], [], []>} : vector<16x32xbf16>, vector<32x128xbf16>, vector<16x128xf32> -> vector<16x128xf32>
    %c0_3 = arith.constant 0 : index
    %c0_4 = arith.constant 0 : index
    %3 = vector.load %arg3[%c0_3, %c0_4] : memref<1x128xf32, #tpu.memory_space<vmem>>, vector<1x128xf32>
    %4 = vector.broadcast %3 : vector<1x128xf32> to vector<16x128xf32>
    %5 = arith.addf %2, %4 : vector<16x128xf32>
    %cst_5 = arith.constant 0.000000e+00 : f32
    %6 = vector.broadcast %cst_5 : f32 to vector<16x128xf32>
    %7 = arith.maximumf %5, %6 : vector<16x128xf32>
    %8 = arith.truncf %7 : vector<16x128xf32> to vector<16x128xbf16>
    %c0_6 = arith.constant 0 : index
    %c0_7 = arith.constant 0 : index
    %9 = vector.load %arg4[%c0_6, %c0_7] : memref<128x32xbf16, #tpu.memory_space<vmem>>, vector<128x32xbf16>
    %cst_8 = arith.constant dense<0.000000e+00> : vector<16x32xf32>
    %10 = tpu.matmul %8, %9, %cst_8 {dimension_numbers = #tpu.dot_dimension_numbers<[1], [0], [0], [1], [0, 0, 1, 1], [], []>} : vector<16x128xbf16>, vector<128x32xbf16>, vector<16x32xf32> -> vector<16x32xf32>
    %c0_9 = arith.constant 0 : index
    %c0_10 = arith.constant 0 : index
    %11 = vector.load %arg5[%c0_9, %c0_10] : memref<1x32xf32, #tpu.memory_space<vmem>>, vector<1x32xf32>
    %12 = vector.broadcast %11 : vector<1x32xf32> to vector<16x32xf32>
    %13 = arith.addf %10, %12 : vector<16x32xf32>
    %c0_11 = arith.constant 0 : index
    %c0_12 = arith.constant 0 : index
    %14 = vector.load %arg6[%c0_11, %c0_12] : memref<16x32xf32, #tpu.memory_space<vmem>>, vector<16x32xf32>
    tpu.vector_store %arg6[%c0_11, %c0_12], %13 {strides = array<i32>} : memref<16x32xf32, #tpu.memory_space<vmem>>, vector<16x32xf32>,
    return
  }
  func.func @transform_0(%arg0: i32) -> (i32, i32) {
    %c0_i32 = arith.constant 0 : i32
    %c0_i32_0 = arith.constant 0 : i32
    return %arg0, %c0_i32 : i32, i32
  }
  func.func @transform_1(%arg0: i32) -> (i32, i32) {
    %c0_i32 = arith.constant 0 : i32
    %c0_i32_0 = arith.constant 0 : i32
    %c0_i32_1 = arith.constant 0 : i32
    return %c0_i32, %c0_i32_0 : i32, i32
  }
  func.func @transform_2(%arg0: i32) -> (i32, i32) {
    %c0_i32 = arith.constant 0 : i32
    %c0_i32_0 = arith.constant 0 : i32
    %c0_i32_1 = arith.constant 0 : i32
    return %c0_i32, %c0_i32_0 : i32, i32
  }
  func.func @transform_3(%arg0: i32) -> (i32, i32) {
    %c0_i32 = arith.constant 0 : i32
    %c0_i32_0 = arith.constant 0 : i32
    %c0_i32_1 = arith.constant 0 : i32
    return %c0_i32, %c0_i32_0 : i32, i32
  }
  func.func @transform_4(%arg0: i32) -> (i32, i32) {
    %c0_i32 = arith.constant 0 : i32
    %c0_i32_0 = arith.constant 0 : i32
    %c0_i32_1 = arith.constant 0 : i32
    return %c0_i32, %c0_i32_0 : i32, i32
  }
  func.func @transform_5(%arg0: i32) -> (i32, i32) {
    %c0_i32 = arith.constant 0 : i32
    %c0_i32_0 = arith.constant 0 : i32
    return %arg0, %c0_i32 : i32, i32
  }
}

</mosaic_0001>

<llo_original>
// kernel: tpu_custom_call.1
$region0: #{tpu_custom_call.1}
  #allocation0 [shape = 'u32[]', space=smem, size = 0x4, offset = 0x4, fixed_abs, tag = 'smem constant byte address 0x4 - core index']
  #allocation1 [shape = 'u32[72,128]{1,0:T(1,128)}', space=vmem, size = 0x9000, scoped, tag = 'internal scratch']
  %s0 = inlined_call_operand.vmem [shape: bf16[16,32], index: 0, kind: input, shape index: {}]
  %s1 = inlined_call_operand.vmem [shape: bf16[32,128], index: 1, kind: input, shape index: {}]
  %s2 = inlined_call_operand.vmem [shape: f32[1,128], index: 2, kind: input, shape index: {}]
  %s3 = inlined_call_operand.vmem [shape: bf16[128,32], index: 3, kind: input, shape index: {}]
  %s4 = inlined_call_operand.vmem [shape: f32[1,32], index: 4, kind: input, shape index: {}]
  %s5 = inlined_call_operand.hbm [shape: f32[16,32], index: 5, kind: output, shape index: {}]
  %s6 = sld [smem:[#allocation0]]
  $region30: #{tpu_custom_call.1} parent=0
    _
  %s8 = ssub.s32 1, %s6
  %s9 = scalar_select 0, %s8, %s6
  $region1: #{tpu_custom_call.1} parent=0
    #allocation2 [shape = 'u8[8192]{0}', space=vmem, size = 0x2000, scoped, tag = 'output window, operand 0, single buffered']
    #allocation3 [shape = 's32[1]{0}', space=sflag, size = 0x4, scoped, tag = 'scoped memory for tpu_custom_call.1']
    %10 = vsyncpa [#allocation3], 0
    // Predicated region
    $region2: #{tpu_custom_call.1} parent=1 // pred_check
      _
    $region3: #{tpu_custom_call.1} parent=1 // pred_check_branch
      %12 = sbr.rel (0) target = $region5
    $region4: #{tpu_custom_call.1} parent=1 // pred_region
      _
    $region5: #{tpu_custom_call.1} parent=1 // pred_fallthru
      _
    // Predicated region
    $region6: #{tpu_custom_call.1} parent=1 // pred_check
      _
    $region7: #{tpu_custom_call.1} parent=1 // pred_check_branch
      %14 = sbr.rel (0) target = $region9
    $region8: #{tpu_custom_call.1} parent=1 // pred_region
      _
    $region9: #{tpu_custom_call.1} parent=1 // pred_fallthru
      _
    // Predicated region
    $region10: #{tpu_custom_call.1} parent=1 // pred_check
      _
    $region11: #{tpu_custom_call.1} parent=1 // pred_check_branch
      %16 = sbr.rel (0) target = $region13
    $region12: #{tpu_custom_call.1} parent=1 // pred_region
      _
    $region13: #{tpu_custom_call.1} parent=1 // pred_fallthru
      _
    // Predicated region
    $region14: #{tpu_custom_call.1} parent=1 // pred_check
      _
    $region15: #{tpu_custom_call.1} parent=1 // pred_check_branch
      %18 = sbr.rel (0) target = $region17
    $region16: #{tpu_custom_call.1} parent=1 // pred_region
      _
    $region17: #{tpu_custom_call.1} parent=1 // pred_fallthru
      _
    // Predicated region
    $region18: #{tpu_custom_call.1} parent=1 // pred_check
      _
    $region19: #{tpu_custom_call.1} parent=1 // pred_check_branch
      %20 = sbr.rel (0) target = $region21
    $region20: #{tpu_custom_call.1} parent=1 // pred_region
      _
    $region21: #{tpu_custom_call.1} parent=1 // pred_fallthru
      _
    %v22 = vld [vmem:[%s0] sm:$0xf]
    %v23 = vld [vmem:[%s0 + $0x4] sm:$0xf]
    %v24 = vld [vmem:[%s1] sm:$0xf]
    %v25 = vld [vmem:[%s1 + $0x4] sm:$0xf]
    %v26 = vld [vmem:[%s1 + $0x8] sm:$0xf]
    %v27 = vld [vmem:[%s1 + $0xc] sm:$0xf]
    %v28 = vld [vmem:[%s2] sm:$0x1]
    %v30 = vperm.slane %v28, 0
    %v34 = vunpack.c.l.b16 %v22
    %v35 = vunpack.c.l.b16 %v23
    %v36 = vpack.c.b16 %v35, %v34
    %v41 = vunpack.c.l.b16 %v24
    %v42 = vunpack.c.l.b16 %v25
    %v43 = vunpack.c.l.b16 %v26
    %v44 = vunpack.c.l.b16 %v27
    %v45 = vpack.c.b16 %v42, %v41
    %v46 = vpack.c.b16 %v44, %v43
    %vm49 = vcmask 261120
    %v51 = vsel %vm49, %v36, 0
    %53 = vmatpush.bf16.msra.mxu0 0
    %54 = vmatpush.bf16.msra.mxu0 0
    %55 = vmatpush.bf16.msra.mxu0 0
    %56 = vmatpush.bf16.msra.mxu0 0
    %57 = vmatpush.bf16.msra.mxu0 0
    %58 = vmatpush.bf16.msra.mxu0 0
    %59 = vmatpush.bf16.msra.mxu0 %v46
    %60 = vmatpush.bf16.msra.mxu0 %v45
    %61 = vmatmul.bf16.gmra.mxu0 %v51
    %v62 = vpop.f32.mrf.mxu0
    %v63 = vadd.f32 %v30, %v62
    %v64 = vpop.f32.mrf.mxu0
    %v65 = vadd.f32 %v30, %v64
    %66 = vdwg.mxu0
    %v67 = vmax.f32 %v63, 0.0
    %v68 = vmax.f32 %v65, 0.0
    %v69 = vpack.c.bf16 %v68, %v67
    %v70 = vld [vmem:[%s3] sm:$0xf]
    %v71 = vld [vmem:[%s3 + $0x4] sm:$0xf]
    %v72 = vld [vmem:[%s3 + $0x8] sm:$0xf]
    %v73 = vld [vmem:[%s3 + $0xc] sm:$0xf]
    %v74 = vld [vmem:[%s3 + $0x10] sm:$0xf]
    %v75 = vld [vmem:[%s3 + $0x14] sm:$0xf]
    %v76 = vld [vmem:[%s3 + $0x18] sm:$0xf]
    %v77 = vld [vmem:[%s3 + $0x1c] sm:$0xf]
    %v78 = vld [vmem:[%s3 + $0x20] sm:$0xf]
    %v79 = vld [vmem:[%s3 + $0x24] sm:$0xf]
    %v80 = vld [vmem:[%s3 + $0x28] sm:$0xf]
    %v81 = vld [vmem:[%s3 + $0x2c] sm:$0xf]
    %v82 = vld [vmem:[%s3 + $0x30] sm:$0xf]
    %v83 = vld [vmem:[%s3 + $0x34] sm:$0xf]
    %v84 = vld [vmem:[%s3 + $0x38] sm:$0xf]
    %v85 = vld [vmem:[%s3 + $0x3c] sm:$0xf]
    %v86 = vld [vmem:[%s4] sm:$0x1]
    %v88 = vperm.slane %v86, 0
    %v106 = vunpack.c.l.b16 %v70
    %v107 = vunpack.c.l.b16 %v71
    %v108 = vunpack.c.l.b16 %v72
    %v109 = vunpack.c.l.b16 %v73
    %v110 = vunpack.c.l.b16 %v74
    %v111 = vunpack.c.l.b16 %v75
    %v112 = vunpack.c.l.b16 %v76
    %v113 = vunpack.c.l.b16 %v77
    %v114 = vunpack.c.l.b16 %v78
    %v115 = vunpack.c.l.b16 %v79
    %v116 = vunpack.c.l.b16 %v80
    %v117 = vunpack.c.l.b16 %v81
    %v118 = vunpack.c.l.b16 %v82
    %v119 = vunpack.c.l.b16 %v83
    %v120 = vunpack.c.l.b16 %v84
    %v121 = vunpack.c.l.b16 %v85
    %v122 = vpack.c.b16 %v107, %v106
    %v123 = vpack.c.b16 %v109, %v108
    %v124 = vpack.c.b16 %v111, %v110
    %v125 = vpack.c.b16 %v113, %v112
    %v126 = vpack.c.b16 %v115, %v114
    %v127 = vpack.c.b16 %v117, %v116
    %v128 = vpack.c.b16 %v119, %v118
    %v129 = vpack.c.b16 %v121, %v120
    %138 = vmatpush.bf16.msra.mxu0 %v129
    %139 = vmatpush.bf16.msra.mxu0 %v128
    %140 = vmatpush.bf16.msra.mxu0 %v127
    %141 = vmatpush.bf16.msra.mxu0 %v126
    %142 = vmatpush.bf16.msra.mxu0 %v125
    %143 = vmatpush.bf16.msra.mxu0 %v124
    %144 = vmatpush.bf16.msra.mxu0 %v123
    %145 = vmatpush.bf16.msra.mxu0 %v122
    %146 = vmatmul.bf16.gmra.mxu0 %v69
    %v147 = vpop.f32.mrf.mxu0
    %v148 = vadd.f32 %v88, %v147
    %v149 = vpop.f32.mrf.mxu0
    %v150 = vadd.f32 %v88, %v149
    %151 = vdwg.mxu0
    %152 = vst.msk [vmem:[#allocation2] sm:$0xff] %vm49, %v148
    %153 = vst.msk [vmem:[#allocation2 + $0x8] sm:$0xff] %vm49, %v150
    // Predicated region
    $region22: #{tpu_custom_call.1} parent=1 // pred_check
      _
    $region23: #{tpu_custom_call.1} parent=1 // pred_check_branch
      %155 = sbr.rel (0) target = $region25
    $region24: #{tpu_custom_call.1} parent=1 // pred_region
      %157 = vsyncadd [#allocation3], 0
      %s158 = sshll.u32 [#allocation2], 4
      %s159 = int_to_ptr.vmem [resolvable:$true] %s158
      %s160 = sshll.u32 %s5, 4
      %s161 = int_to_ptr.hbm [resolvable:$true] %s160
      %166 = dma.vmem_to_hbm [thread:$0]  %s159, 256, %s161, [#allocation3], 128, 128, 8
    $region25: #{tpu_custom_call.1} parent=1 // pred_fallthru
      _
    // Predicated region
    $region26: #{tpu_custom_call.1} parent=1 // pred_check
      _
    $region27: #{tpu_custom_call.1} parent=1 // pred_check_branch
      %168 = sbr.rel (0) target = $region29
    $region28: #{tpu_custom_call.1} parent=1 // pred_region
      %170 = dma.done [#allocation3], 256
    $region29: #{tpu_custom_call.1} parent=1 // pred_fallthru
      _
    %171 = vsyncpa [#allocation3], 1

</llo_original>
